<compile_context>
chip_gen: v6e
topology: v6e:2x2x1
jax: 0.10.0
libtpu: 0.0.40
codegen_flags: <defaults>
</compile_context>

<pallas_src>
import functools
import math

import jax
import jax.numpy as jnp
from jax import lax
from jax.experimental import pallas as pl
from jax.experimental.pallas import tpu as pltpu


def _round_up(x, m):
    return ((x + m - 1) // m) * m


def _cdiv(a, b):
    return (a + b - 1) // b


def _label_smoothing_kernel(x_ref, tgt_ref, *out_refs, size, padding_idx,
                            confidence, fill, row_const, tv, v_ragged,
                            write_true_dist):
    """One grid step handles a (tn, tv) tile: rows i*tn.., vocab cols j*tv..

    Writes the smoothed target distribution tile (optional) and this block's
    partial KL-divergence sum.  td*log(td) is folded into the compile-time
    per-valid-row constant `row_const`, added once (on the j==0 vocab block).
    """
    if write_true_dist:
        td_ref, partial_ref = out_refs
    else:
        (partial_ref,) = out_refs

    j = pl.program_id(1)
    x = x_ref[...]                                 # (tn, tv) f32 log-probs
    tgt = tgt_ref[...]                             # (tn, 1)  i32 targets

    col = lax.broadcasted_iota(jnp.int32, x.shape, 1) + j * tv   # global col id
    is_target = col == tgt                         # scatter_(1, tgt, confidence)
    # true_dist[:, padding_idx] = 0 ; rows with tgt == padding_idx -> 0.
    zero_mask = (col == padding_idx) | (tgt == padding_idx)
    if v_ragged:
        zero_mask = zero_mask | (col >= size)      # lanes past the real vocab

    td = jnp.where(zero_mask, jnp.float32(0.0),
                   jnp.where(is_target, jnp.float32(confidence),
                             jnp.float32(fill)))
    if write_true_dist:
        td_ref[...] = td

    # KLDivLoss(size_average=False) partial:  sum td*log(td) - sum td*x.
    # The outer select (not the 0 in td) kills garbage x rows/lanes read past
    # the array bounds, so NaN/Inf there cannot leak into the sum.
    tdx = jnp.where(zero_mask, jnp.float32(0.0), td * x)
    block_loss = -jnp.sum(tdx)

    if row_const != 0.0:
        n_valid = jnp.sum((tgt != padding_idx).astype(jnp.float32))
        block_loss = block_loss + jnp.where(
            j == 0, n_valid * jnp.float32(row_const), jnp.float32(0.0))

    partial_ref[...] = jnp.zeros_like(partial_ref) + block_loss


def label_smoothing_forward(x, tgt, *, size, padding_idx, smoothing,
                            compute_true_dist=True):
    """Returns (loss_scalar, true_dist or None). x: (N, V) f32, tgt: (N,)."""
    N, V = x.shape
    assert V == size

    # Generation-aware VMEM budget (v7x: 64 MiB physical; v5e/v6e: 128 MiB).
    try:
        vmem_cap = int(pltpu.get_tpu_info().vmem_capacity_bytes)
    except Exception:
        vmem_cap = 64 * 1024 * 1024
    tile_budget = max((vmem_cap * 5) // 8, 16 * 1024 * 1024)  # ~40 MiB v7x, ~80 MiB v5e/v6e
    vmem_limit = max((vmem_cap * 3) // 4, 32 * 1024 * 1024)

    # Vocab tile: tile V only when lane-aligned; otherwise the block must span
    # the full (unpadded) vocab (legal: block dim == array dim).
    tv = min(V, 8192) if V % 128 == 0 else V
    num_v_blocks = _cdiv(V, tv)
    v_ragged = num_v_blocks * tv != V

    # Row tile: largest multiple of 8 whose double-buffered footprint
    # (x in + optional td out) fits the budget; capped at 1024 rows and so
    # that N splits into >= 2 row blocks (v7x megacore) when N allows.
    per_row_bytes = (16 if compute_true_dist else 8) * tv   # 2 bufs * arrays * 4 B
    tn = max(8, ((tile_budget // per_row_bytes) // 8) * 8)
    tn = min(tn, 1024)
    tn = min(tn, max(8, _round_up(_cdiv(N, 2), 8)))
    num_row_blocks = _cdiv(N, tn)
    N_pad = num_row_blocks * tn

    x_f = x.astype(jnp.float32)          # no (N, V) pad: kernel reads raw rows
    tgt_i = tgt.astype(jnp.int32)
    if N_pad != N:
        # Rows read past N look like padding tokens -> zero td, zero loss.
        tgt_i = jnp.pad(tgt_i, (0, N_pad - N), constant_values=padding_idx)
    tgt2d = tgt_i.reshape(N_pad, 1)

    confidence = 1.0 - smoothing
    fill = smoothing / (size - 2)
    c_conf = confidence * math.log(confidence) if confidence > 0.0 else 0.0
    c_fill = fill * math.log(fill) if fill > 0.0 else 0.0
    row_const = c_conf + (size - 2) * c_fill   # sum td*log(td) per valid row

    kernel = functools.partial(
        _label_smoothing_kernel,
        size=size, padding_idx=padding_idx,
        confidence=confidence, fill=fill, row_const=row_const,
        tv=tv, v_ragged=v_ragged, write_true_dist=compute_true_dist)

    out_shape = []
    out_specs = []
    if compute_true_dist:
        out_shape.append(jax.ShapeDtypeStruct((N, V), jnp.float32))
        out_specs.append(pl.BlockSpec((tn, tv), lambda i, j: (i, j)))
    # Per-block partial sums; trailing (1, 1) dims keep the block shape equal
    # to the array's last-two dims (tiling-rule safe for any block count).
    out_shape.append(jax.ShapeDtypeStruct(
        (num_row_blocks, num_v_blocks, 1, 1), jnp.float32))
    out_specs.append(pl.BlockSpec((1, 1, 1, 1), lambda i, j: (i, j, 0, 0)))

    td_bytes = N * V * 4 if compute_true_dist else 0
    cost = pl.CostEstimate(
        flops=4 * N * V, transcendentals=0,
        bytes_accessed=N * V * 4 + td_bytes + N_pad * 4
        + num_row_blocks * num_v_blocks * 4)

    results = pl.pallas_call(
        kernel,
        out_shape=tuple(out_shape),
        grid_spec=pltpu.PrefetchScalarGridSpec(
            num_scalar_prefetch=0,
            grid=(num_row_blocks, num_v_blocks),
            in_specs=[
                pl.BlockSpec((tn, tv), lambda i, j: (i, j)),
                pl.BlockSpec((tn, 1), lambda i, j: (i, 0)),
            ],
            out_specs=out_specs,
        ),
        compiler_params=pltpu.CompilerParams(
            dimension_semantics=("parallel", "parallel"),
            vmem_limit_bytes=int(vmem_limit)),
        cost_estimate=cost,
    )(x_f, tgt2d)

    if compute_true_dist:
        td, partials = results
    else:
        td = None
        (partials,) = results

    loss = jnp.sum(partials)
    return loss, td


def _reference(x, tgt, *, size, padding_idx, smoothing):
    """Pure-JAX reference reproducing the PyTorch module semantics."""
    confidence = 1.0 - smoothing
    N, V = x.shape
    col = jnp.arange(V)[None, :]
    tgt2d = tgt[:, None]
    td = jnp.where(col == tgt2d, confidence, smoothing / (size - 2))
    td = jnp.where(col == padding_idx, 0.0, td)
    td = jnp.where(tgt2d == padding_idx, 0.0, td)
    contrib = jnp.where(td > 0, td * (jnp.log(jnp.where(td > 0, td, 1.0)) - x), 0.0)
    return jnp.sum(contrib), td


if __name__ == "__main__":
    # Module "parameters": size (vocab), padding_idx, smoothing.
    SIZE = 32
    PADDING_IDX = 0
    SMOOTHING = 0.1
    N = 8  # number of tokens

    key = jax.random.PRNGKey(0)
    kx, kt = jax.random.split(key)

    # x must be log-probabilities (input to KLDivLoss).
    logits = jax.random.normal(kx, (N, SIZE), dtype=jnp.float32)
    x = jax.nn.log_softmax(logits, axis=-1)

    # Targets in [0, SIZE); force a couple of padding rows to exercise masking.
    tgt = jax.random.randint(kt, (N,), 0, SIZE, dtype=jnp.int32)
    tgt = tgt.at[1].set(PADDING_IDX).at[5].set(PADDING_IDX)

    loss, true_dist = label_smoothing_forward(
        x, tgt, size=SIZE, padding_idx=PADDING_IDX, smoothing=SMOOTHING)
    loss = jax.block_until_ready(loss)
    true_dist = jax.block_until_ready(true_dist)

    ref_loss, ref_td = _reference(
        x, tgt, size=SIZE, padding_idx=PADDING_IDX, smoothing=SMOOTHING)

    assert true_dist.shape == (N, SIZE)
    assert jnp.allclose(true_dist, ref_td, atol=1e-6), "true_dist mismatch"
    assert jnp.allclose(loss, ref_loss, rtol=1e-5, atol=1e-5), "loss mismatch"

    # Loss-only fast path (skips the true_dist HBM store).
    loss_only, none_td = label_smoothing_forward(
        x, tgt, size=SIZE, padding_idx=PADDING_IDX, smoothing=SMOOTHING,
        compute_true_dist=False)
    loss_only = jax.block_until_ready(loss_only)
    assert none_td is None
    assert jnp.allclose(loss_only, ref_loss, rtol=1e-5, atol=1e-5), "loss-only mismatch"

    print("KERNEL_OK")
</pallas_src>

<mosaic_0001>
module attributes {stable_mosaic.version = 11 : i64} {
  func.func @_label_smoothing_kernel(%arg0: i32, %arg1: i32, %arg2: memref<8x32xf32, #tpu.memory_space<vmem>>, %arg3: memref<8x1xi32, #tpu.memory_space<vmem>>, %arg4: memref<8x32xf32, #tpu.memory_space<vmem>>, %arg5: memref<1x1x1x1xf32, #tpu.memory_space<vmem>>) attributes {dimension_semantics = [#tpu.dimension_semantics<parallel>, #tpu.dimension_semantics<parallel>], iteration_bounds = array<i64: 1, 1>, scalar_prefetch = 0 : i64, scratch_operands = 0 : i64, tpu.core_type = #tpu.core_type<tc>, window_params = [{transform_indices = @transform_0, window_bounds = array<i64: 8, 32>}, {transform_indices = @transform_1, window_bounds = array<i64: 8, 1>}, {transform_indices = @transform_2, window_bounds = array<i64: 8, 32>}, {transform_indices = @transform_3, window_bounds = array<i64: 1, 1, 1, 1>}]} {
    %c0 = arith.constant 0 : index
    %c0_0 = arith.constant 0 : index
    %0 = vector.load %arg2[%c0, %c0_0] : memref<8x32xf32, #tpu.memory_space<vmem>>, vector<8x32xf32>
    %c0_1 = arith.constant 0 : index
    %c0_2 = arith.constant 0 : index
    %1 = vector.load %arg3[%c0_1, %c0_2] : memref<8x1xi32, #tpu.memory_space<vmem>>, vector<8x1xi32>
    %2 = tpu.iota {dimensions = array<i32: 1>} : vector<8x32xi32>
    %c32_i32 = arith.constant 32 : i32
    %3 = arith.muli %arg1, %c32_i32 : i32
    %4 = vector.broadcast %3 : i32 to vector<8x32xi32>
    %5 = arith.addi %2, %4 : vector<8x32xi32>
    %6 = vector.broadcast %1 : vector<8x1xi32> to vector<8x32xi32>
    %7 = arith.cmpi eq, %5, %6 : vector<8x32xi32>
    %c0_i32 = arith.constant 0 : i32
    %8 = vector.broadcast %c0_i32 : i32 to vector<8x32xi32>
    %9 = arith.cmpi eq, %5, %8 : vector<8x32xi32>
    %c0_i32_3 = arith.constant 0 : i32
    %10 = vector.broadcast %c0_i32_3 : i32 to vector<8x1xi32>
    %11 = arith.cmpi eq, %1, %10 : vector<8x1xi32>
    %12 = vector.broadcast %11 : vector<8x1xi1> to vector<8x32xi1>
    %13 = arith.ori %9, %12 : vector<8x32xi1>
    %cst = arith.constant 0.899999976 : f32
    %cst_4 = arith.constant 0.00333333341 : f32
    %14 = vector.broadcast %cst : f32 to vector<8x32xf32>
    %15 = vector.broadcast %cst_4 : f32 to vector<8x32xf32>
    %16 = arith.select %7, %14, %15 : vector<8x32xi1>, vector<8x32xf32>
    %cst_5 = arith.constant 0.000000e+00 : f32
    %17 = vector.broadcast %cst_5 : f32 to vector<8x32xf32>
    %18 = arith.select %13, %17, %16 : vector<8x32xi1>, vector<8x32xf32>
    %c0_6 = arith.constant 0 : index
    %c0_7 = arith.constant 0 : index
    %19 = vector.load %arg4[%c0_6, %c0_7] : memref<8x32xf32, #tpu.memory_space<vmem>>, vector<8x32xf32>
    tpu.vector_store %arg4[%c0_6, %c0_7], %18 {strides = array<i32>} : memref<8x32xf32, #tpu.memory_space<vmem>>, vector<8x32xf32>,
    %20 = arith.mulf %18, %0 : vector<8x32xf32>
    %cst_8 = arith.constant 0.000000e+00 : f32
    %21 = vector.broadcast %cst_8 : f32 to vector<8x32xf32>
    %22 = arith.select %13, %21, %20 : vector<8x32xi1>, vector<8x32xf32>
    %23 = vector.shape_cast %22 : vector<8x32xf32> to vector<1x8x32xf32>
    %cst_9 = arith.constant dense<0.000000e+00> : vector<1xf32>
    %24 = vector.multi_reduction <add>, %23, %cst_9 [1, 2] : vector<1x8x32xf32> to vector<1xf32>
    %25 = vector.shape_cast %24 : vector<1xf32> to vector<1x1x1xf32>
    %26 = vector.extract %25[0, 0, 0] : f32 from vector<1x1x1xf32>
    %cst_10 = arith.constant 0.000000e+00 : f32
    %27 = arith.subf %cst_10, %26 : f32
    %c0_i32_11 = arith.constant 0 : i32
    %28 = vector.broadcast %c0_i32_11 : i32 to vector<8x1xi32>
    %29 = arith.cmpi ne, %1, %28 : vector<8x1xi32>
    %30 = arith.extui %29 : vector<8x1xi1> to vector<8x1xi32>
    %31 = arith.sitofp %30 : vector<8x1xi32> to vector<8x1xf32>
    %32 = vector.shape_cast %31 : vector<8x1xf32> to vector<1x8x1xf32>
    %cst_12 = arith.constant dense<0.000000e+00> : vector<1xf32>
    %33 = vector.multi_reduction <add>, %32, %cst_12 [1, 2] : vector<1x8x1xf32> to vector<1xf32>
    %34 = vector.shape_cast %33 : vector<1xf32> to vector<1x1x1xf32>
    %35 = vector.extract %34[0, 0, 0] : f32 from vector<1x1x1xf32>
    %c0_i32_13 = arith.constant 0 : i32
    %36 = arith.cmpi eq, %arg1, %c0_i32_13 : i32
    %cst_14 = arith.constant -0.665202737 : f32
    %37 = arith.mulf %35, %cst_14 : f32
    %cst_15 = arith.constant 0.000000e+00 : f32
    %38 = arith.select %36, %37, %cst_15 : f32
    %39 = arith.addf %27, %38 : f32
    %cst_16 = arith.constant 0.000000e+00 : f32
    %40 = vector.broadcast %cst_16 : f32 to vector<1x1x1x1xf32>
    %41 = vector.broadcast %39 : f32 to vector<1x1x1x1xf32>
    %42 = arith.addf %40, %41 : vector<1x1x1x1xf32>
    %c0_17 = arith.constant 0 : index
    %c0_18 = arith.constant 0 : index
    %c0_19 = arith.constant 0 : index
    %c0_20 = arith.constant 0 : index
    %43 = vector.load %arg5[%c0_17, %c0_18, %c0_19, %c0_20] : memref<1x1x1x1xf32, #tpu.memory_space<vmem>>, vector<1x1x1x1xf32>
    tpu.vector_store %arg5[%c0_17, %c0_18, %c0_19, %c0_20], %42 {strides = array<i32>} : memref<1x1x1x1xf32, #tpu.memory_space<vmem>>, vector<1x1x1x1xf32>,
    return
  }
  func.func @transform_0(%arg0: i32, %arg1: i32) -> (i32, i32) {
    %c0_i32 = arith.constant 0 : i32
    return %arg0, %arg1 : i32, i32
  }
  func.func @transform_1(%arg0: i32, %arg1: i32) -> (i32, i32) {
    %c0_i32 = arith.constant 0 : i32
    %c0_i32_0 = arith.constant 0 : i32
    return %arg0, %c0_i32 : i32, i32
  }
  func.func @transform_2(%arg0: i32, %arg1: i32) -> (i32, i32) {
    %c0_i32 = arith.constant 0 : i32
    return %arg0, %arg1 : i32, i32
  }
  func.func @transform_3(%arg0: i32, %arg1: i32) -> (i32, i32, i32, i32) {
    %c0_i32 = arith.constant 0 : i32
    %c0_i32_0 = arith.constant 0 : i32
    %c0_i32_1 = arith.constant 0 : i32
    return %arg0, %arg1, %c0_i32, %c0_i32_0 : i32, i32, i32, i32
  }
}

</mosaic_0001>

<llo_original>
// kernel: tpu_custom_call.1
$region0: #{tpu_custom_call.1}
  #allocation0 [shape = 'u32[]', space=smem, size = 0x4, offset = 0x4, fixed_abs, tag = 'smem constant byte address 0x4 - core index']
  #allocation1 [shape = 'u32[144,128]{1,0:T(1,128)}', space=vmem, size = 0x12000, scoped, tag = 'internal scratch']
  %s0 = inlined_call_operand.vmem [shape: f32[8,32], index: 0, kind: input, shape index: {}]
  %s1 = inlined_call_operand.vmem [shape: s32[8,1], index: 1, kind: input, shape index: {}]
  %s2 = inlined_call_operand.hbm [shape: f32[8,32], index: 2, kind: output, shape index: {0}]
  %s3 = inlined_call_operand.hbm [shape: f32[1,1,1,1], index: 3, kind: output, shape index: {1}]
  %4 = xla_tuple %s2, %s3
  %s5 = sld [smem:[#allocation0]]
  $region26: #{tpu_custom_call.1} parent=0
    _
  %s7 = ssub.s32 1, %s5
  %s8 = scalar_select 0, %s7, %s5
  $region1: #{tpu_custom_call.1} parent=0
    #allocation2 [shape = 'u8[4096]{0}', space=vmem, size = 0x1000, scoped, tag = 'output window, operand 0, single buffered']
    #allocation3 [shape = 's32[1]{0}', space=sflag, size = 0x4, scoped, tag = 'scoped memory for tpu_custom_call.1']
    #allocation4 [shape = 'u8[512]{0}', space=vmem, size = 0x400, scoped, tag = 'output window, operand 1, single buffered']
    #allocation5 [shape = 's32[1]{0}', space=sflag, size = 0x4, scoped, tag = 'scoped memory for tpu_custom_call.1']
    %9 = vsyncpa [#allocation3], 0
    %10 = vsyncpa [#allocation5], 0
    // Predicated region
    $region2: #{tpu_custom_call.1} parent=1 // pred_check
      _
    $region3: #{tpu_custom_call.1} parent=1 // pred_check_branch
      %12 = sbr.rel (0) target = $region5
    $region4: #{tpu_custom_call.1} parent=1 // pred_region
      _
    $region5: #{tpu_custom_call.1} parent=1 // pred_fallthru
      _
    // Predicated region
    $region6: #{tpu_custom_call.1} parent=1 // pred_check
      _
    $region7: #{tpu_custom_call.1} parent=1 // pred_check_branch
      %14 = sbr.rel (0) target = $region9
    $region8: #{tpu_custom_call.1} parent=1 // pred_region
      _
    $region9: #{tpu_custom_call.1} parent=1 // pred_fallthru
      _
    %v15 = vld [vmem:[%s0] sm:$0xff]
    %v16 = vld [vmem:[%s1] sm:$0xff]
    %v17 = vlaneseq
    %v18 = vand.u32 %v17, 127
    %s19 = smul.u32 0, 32
    %v20 = vstv %s19
    %v21 = vadd.s32 %v18, %v20
    %22 = vset.pattern.permute.xlu0 0
    %23 = vperm.xlu0 %22, %v16
    %v24 = vpop.permute.xlu0 %23
    %vm25 = vcmp.eq.s32.totalorder %v21, %v24
    %vm26 = vcmp.eq.s32.totalorder %v21, 0
    %vm27 = vcmp.eq.s32.totalorder %v16, 0
    %v28 = vsel %vm27, 1, 0
    %29 = vset.pattern.permute.xlu0 0
    %30 = vperm.xlu0 %29, %v28
    %v31 = vpop.permute.xlu0 %30
    %vm32 = vcmp.eq.s32.totalorder %v31, 1
    %vm33 = vmor %vm26, %vm32
    %v34 = vsel %vm25, 0.9, 0.0033333334
    %v35 = vsel %vm33, 0.0, %v34
    %vm36 = vcmask 261120
    %37 = vst.msk [vmem:[#allocation2] sm:$0xff] %vm36, %v35
    %v38 = vmul.f32 %v35, %v15
    %v39 = vsel %vm33, 0.0, %v38
    %v40 = vsel %vm36, %v39, 0.0
    %41 = vadd.xlane.f32.xlu0 %v40
    %v42 = vpop.xlane.xlu0 %41
    %v43 = vrot.slane %v42, 4
    %v44 = vadd.f32 %v42, %v43
    %v45 = vrot.slane %v44, 2
    %v46 = vadd.f32 %v44, %v45
    %v47 = vrot.slane %v46, 1
    %v48 = vadd.f32 %v46, %v47
    %s49 = vtos %v48
    %s50 = ssub.f32 0.0, %s49
    %vm51 = vcmp.ne.s32.totalorder %v16, 0
    %v52 = vsel %vm51, 1, 0
    %v53 = vcvt.s32.f32 %v52
    %vm54 = vcmask 7168
    %v55 = vsel %vm54, %v53, 0.0
    %56 = vadd.xlane.f32.xlu0 %v55
    %v57 = vpop.xlane.xlu0 %56
    %v58 = vrot.slane %v57, 4
    %v59 = vadd.f32 %v57, %v58
    %v60 = vrot.slane %v59, 2
    %v61 = vadd.f32 %v59, %v60
    %v62 = vrot.slane %v61, 1
    %v63 = vadd.f32 %v61, %v62
    %s64 = vtos %v63
    %p65 = scmp.eq.s32.totalorder 0, 0
    %s66 = smul.f32 %s64, -0.66520274
    %s67 = scalar_select %p65, %s66, 0.0
    %s68 = sadd.f32 %s50, %s67
    %v69 = vstv %s68
    %v70 = vadd.f32 %v69, 0.0
    %vm71 = vcmask 0
    %72 = vst.msk [vmem:[#allocation4] sm:$0x1] %vm71, %v70
    // Predicated region
    $region10: #{tpu_custom_call.1} parent=1 // pred_check
      _
    $region11: #{tpu_custom_call.1} parent=1 // pred_check_branch
      %74 = sbr.rel (0) target = $region13
    $region12: #{tpu_custom_call.1} parent=1 // pred_region
      %s76 = ssub.s32 128, 128
      %77 = vsyncadd [#allocation3], %s76
      %s79 = sshll.u32 [#allocation2], 4
      %s80 = int_to_ptr.vmem [resolvable:$true] %s79
      %82 = dma.vmem_to_hbm [thread:$0]  %s80, 128, %s2, [#allocation3]
    $region13: #{tpu_custom_call.1} parent=1 // pred_fallthru
      _
    // Predicated region
    $region14: #{tpu_custom_call.1} parent=1 // pred_check
      _
    $region15: #{tpu_custom_call.1} parent=1 // pred_check_branch
      %84 = sbr.rel (0) target = $region17
    $region16: #{tpu_custom_call.1} parent=1 // pred_region
      %s86 = ssub.s32 16, 16
      %87 = vsyncadd [#allocation5], %s86
      %s89 = sshll.u32 [#allocation4], 4
      %s90 = int_to_ptr.vmem [resolvable:$true] %s89
      %92 = dma.vmem_to_hbm [thread:$0]  %s90, 16, %s3, [#allocation5]
    $region17: #{tpu_custom_call.1} parent=1 // pred_fallthru
      _
    // Predicated region
    $region18: #{tpu_custom_call.1} parent=1 // pred_check
      _
    $region19: #{tpu_custom_call.1} parent=1 // pred_check_branch
      %94 = sbr.rel (0) target = $region21
    $region20: #{tpu_custom_call.1} parent=1 // pred_region
      %95 = dma.done [#allocation3], 128
    $region21: #{tpu_custom_call.1} parent=1 // pred_fallthru
      _
    // Predicated region
    $region22: #{tpu_custom_call.1} parent=1 // pred_check
      _
    $region23: #{tpu_custom_call.1} parent=1 // pred_check_branch
      %97 = sbr.rel (0) target = $region25
    $region24: #{tpu_custom_call.1} parent=1 // pred_region
      %98 = dma.done [#allocation5], 16
    $region25: #{tpu_custom_call.1} parent=1 // pred_fallthru
      _
    %99 = vsyncpa [#allocation3], 1
    %100 = vsyncpa [#allocation5], 1

</llo_original>
